<compile_context>
chip_gen: v7x
topology: tpu7x:2x2x1
jax: 0.10.0
libtpu: 0.0.40
codegen_flags: <defaults>
</compile_context>

<pallas_src>
import math
import numpy as np
import jax
import jax.numpy as jnp
from jax.experimental import pallas as pl
from jax.experimental.pallas import tpu as pltpu


def _gauss_taps(sigma):
    """1-D Gaussian taps, identical to the PyTorch module's weight vector."""
    sigma = float(sigma)
    N = int(math.ceil(sigma * 3.0 / 2.0)) * 2 + 1
    xs = np.linspace(-(N // 2), N // 2, N)
    w = np.exp(-np.power(xs, 2) / (2.0 * sigma * sigma))
    return w / w.sum()                                      # float64, length N


def _banded_replicate_matrix(L, taps):
    """(L, L) matrix M with (M @ v)[i] = sum_k taps[k] * v[clamp(i + k - p)]."""
    N = len(taps)
    p = N // 2
    M = np.zeros((L, L), dtype=np.float64)
    for i in range(L):
        for k in range(N):
            j = min(max(i + k - p, 0), L - 1)
            M[i, j] += taps[k]
    return M


def _round_up(x, m):
    return ((x + m - 1) // m) * m


def _vmem_budget_and_limit():
    """Generation-aware VMEM numbers.

    Uses the physical VMEM capacity when queryable (v5e/v6e: 128 MiB,
    v7x: 64 MiB per TensorCore); falls back to the conservative v7x figure.
    Returns (resident-model budget for tile sizing, Mosaic scoped limit).
    """
    try:
        cap = int(pltpu.get_tpu_info().vmem_capacity_bytes)
    except Exception:
        cap = 64 * 1024 * 1024                      # conservative: v7x per-TC
    limit = min(cap * 3 // 4, 100 * 1024 * 1024)    # 48 MiB (v7x) / 96 MiB (v5e/v6e)
    budget = min(cap * 3 // 8, 64 * 1024 * 1024)    # 24 MiB (v7x) / 48 MiB (v5e/v6e)
    return budget, limit


def _choose_bc_tile(BC, per_channel_bytes, vmem_budget_bytes,
                    min_block_bytes=512 * 1024,
                    min_grid_steps=8,
                    min_total_split_bytes=4 * 1024 * 1024):
    """How many (D, H*W) channel slabs each grid step processes.

    Pick the largest divisor of BC that fits the VMEM budget.  Only split
    into >= min_grid_steps grid steps (DMA pipelining + v7x 2-TC megacore)
    when the total working set is big enough to care, and never shrink the
    per-step block below ~min_block_bytes just to create steps — block size
    is the dominant HBM-roofline lever at small shapes.
    """
    per_channel_bytes = max(int(per_channel_bytes), 1)
    cap = max(1, int(vmem_budget_bytes) // per_channel_bytes)
    total = BC * per_channel_bytes
    if total >= min_total_split_bytes and BC >= min_grid_steps:
        floor_ch = max(1, min_block_bytes // per_channel_bytes)
        cap = min(cap, max(BC // min_grid_steps, floor_ch))
    best = 1
    for d in range(1, BC + 1):
        if BC % d == 0 and d <= cap:
            best = d
    return best


def _make_fused_kernel(bc_tile, D, HW_pad, taps, pad):
    """Fused kernel: D pass (VPU taps) + H/W pass (one batched MXU matmul).

    x_ref    : (bc_tile, D, HW_pad)  input block (I/O dtype)
    mhwT_ref : (HW_pad, HW_pad)      kron(M_H, M_W).T, lane-padded
    o_ref    : (bc_tile, D, HW_pad)  output block (same dtype as input)
    """
    taps = tuple(float(t) for t in taps)
    n_taps = len(taps)

    def kernel(x_ref, mhwT_ref, o_ref):
        # Single load + cast; f32 accumulation across all passes, cast back
        # to the I/O dtype only at the final store.
        x = x_ref[...].astype(jnp.float32)                     # (bc, D, HW)

        # ---- D pass: N-tap shifted multiply-add along the sublane axis ----
        # Replicate ('edge') boundaries are built in VMEM (small concat of
        # the first/last D-rows); all the arithmetic is constant-coefficient
        # VPU work that overlaps with the MXU matmul below.
        top = x[:, 0:1, :]
        bot = x[:, D - 1:D, :]
        xpad = jnp.concatenate([top] * pad + [x] + [bot] * pad, axis=1)
        acc = taps[0] * xpad[:, 0:D, :]
        for k in range(1, n_taps):
            acc = acc + taps[k] * xpad[:, k:k + D, :]          # (bc, D, HW) f32

        # ---- fused H+W pass: ONE batched MXU matmul over the whole block --
        # (bc*D, HW) keeps HW as the lane dim; D(=8) fills sublanes, so the
        # reshape is a free relayout and M = bc_tile*D instead of 8.
        y2 = acc.reshape(bc_tile * D, HW_pad)
        z2 = jnp.dot(y2, mhwT_ref[...],
                     preferred_element_type=jnp.float32,
                     precision=jax.lax.Precision.HIGHEST)
        o_ref[...] = z2.reshape(bc_tile, D, HW_pad).astype(o_ref.dtype)

    return kernel


class GaussianSmoothing:
    """Fused JAX/Pallas port of the PyTorch GaussianSmoothing module.

    A single pallas_call reads each (D, H*W) channel slab from HBM once,
    applies the D / H / W Gaussian passes (with replicate padding) entirely
    in VMEM — D via VPU taps, H+W via one banded MXU matmul — and writes the
    result back once.
    """

    # Largest padded H*W for which the fused kron(M_H, M_W) matrix is kept
    # in VMEM.
    # TODO(synk): for larger planes, split into per-axis banded matmuls
    # (lane-dense W pass + in-VMEM transpose for the H pass) and tile D with
    # an (N-1)-row halo instead of holding a full channel slab per grid step.
    _MAX_FUSED_HW = 1024

    def __init__(self, sigma):
        taps = _gauss_taps(sigma)
        self._taps = tuple(float(v) for v in taps)
        self.N = len(self._taps)
        self.pad = self.N // 2
        self.weight = list(self._taps)
        self._mat_cache = {}

    def _hw_matrix(self, H, W, HW_pad):
        key = (H, W, HW_pad)
        if key not in self._mat_cache:
            m_h = _banded_replicate_matrix(H, self._taps)
            m_w = _banded_replicate_matrix(W, self._taps)
            HW = H * W
            m = np.zeros((HW_pad, HW_pad), dtype=np.float64)
            m[:HW, :HW] = np.kron(m_h, m_w).T         # fused H-then-W pass
            self._mat_cache[key] = jnp.asarray(m, dtype=jnp.float32)
        return self._mat_cache[key]

    def __call__(self, x):
        # x: (B, C, D, H, W)  NCDHW
        B, C, D, H, W = x.shape
        BC, HW = B * C, H * W
        HW_pad = _round_up(HW, 128)                   # full 128-lane vregs
        if HW_pad > self._MAX_FUSED_HW:
            raise NotImplementedError(
                f"fused H*W pass supports padded H*W <= {self._MAX_FUSED_HW}; "
                "see TODO(synk) in GaussianSmoothing for the large-volume path")

        m_hw_T = self._hw_matrix(H, W, HW_pad)

        # Lane-dense HBM layout: minor dim is (padded) H*W.
        y = x.reshape(BC, D, HW)
        if HW_pad != HW:
            y = jnp.pad(y, ((0, 0), (0, 0), (0, HW_pad - HW)))

        itemsize = jnp.dtype(x.dtype).itemsize
        budget, vmem_limit = _vmem_budget_and_limit()
        # Resident model per channel: double-buffered input + output blocks
        # plus the in-kernel f32 temporaries (x, xpad, acc, matmul result).
        per_channel = (4 * D * HW_pad * itemsize
                       + 6 * (D + 2 * self.pad) * HW_pad * 4)
        mat_resident = 2 * HW_pad * HW_pad * 4        # double-buffered constant
        bc_tile = _choose_bc_tile(BC, per_channel,
                                  max(budget - mat_resident, per_channel))
        grid = (BC // bc_tile,)

        out = pl.pallas_call(
            _make_fused_kernel(bc_tile, D, HW_pad, self._taps, self.pad),
            out_shape=jax.ShapeDtypeStruct((BC, D, HW_pad), x.dtype),
            grid=grid,
            in_specs=[
                pl.BlockSpec((bc_tile, D, HW_pad), lambda i: (i, 0, 0)),
                # Constant matrix, same block every step.
                # TODO(synk): on v7x, pipeline_mode=pl.Buffered(1) here would
                # reclaim its second buffer (~HW_pad^2*4 bytes) for bc_tile.
                pl.BlockSpec((HW_pad, HW_pad), lambda i: (0, 0)),
            ],
            out_specs=pl.BlockSpec((bc_tile, D, HW_pad), lambda i: (i, 0, 0)),
            compiler_params=pltpu.CompilerParams(
                dimension_semantics=("parallel",),
                vmem_limit_bytes=int(vmem_limit),
            ),
        )(y, m_hw_T)

        if HW_pad != HW:
            out = out[:, :, :HW]
        return out.reshape(B, C, D, H, W)


def _reference(x, taps, pad):
    """Pure-JAX reference: sequential separable conv with replicate padding."""
    B, C, D, H, W = x.shape
    y = x.reshape(B * C, D, H, W).astype(jnp.float32)
    for axis in (1, 2, 3):
        cfg = [(0, 0)] * 4
        cfg[axis] = (pad, pad)
        yp = jnp.pad(y, cfg, mode="edge")
        L = y.shape[axis]
        acc = jnp.zeros_like(y)
        for k, wk in enumerate(taps):
            acc = acc + wk * jax.lax.slice_in_dim(yp, k, k + L, axis=axis)
        y = acc
    return y.reshape(B, C, D, H, W).astype(x.dtype)


if __name__ == "__main__":
    smoother = GaussianSmoothing(sigma=1.0)          # N = 5 taps, pad = 2

    # Case 1: lane-dense shape (H*W = 128) — single large block, one grid step.
    key = jax.random.PRNGKey(0)
    B, C, D, H, W = 2, 4, 8, 8, 16
    x = jax.random.normal(key, (B, C, D, H, W), dtype=jnp.float32)
    out = jax.block_until_ready(smoother(x))
    ref = jax.block_until_ready(_reference(x, smoother.weight, smoother.pad))
    np.testing.assert_allclose(np.asarray(out), np.asarray(ref),
                               rtol=1e-5, atol=1e-5)
    assert out.shape == x.shape and out.dtype == x.dtype

    # Case 2: H*W = 60 — exercises the lane-padding (pad to 128) + trim path.
    x2 = jax.random.normal(jax.random.PRNGKey(1), (1, 2, 8, 6, 10),
                           dtype=jnp.float32)
    out2 = jax.block_until_ready(smoother(x2))
    ref2 = jax.block_until_ready(_reference(x2, smoother.weight, smoother.pad))
    np.testing.assert_allclose(np.asarray(out2), np.asarray(ref2),
                               rtol=1e-5, atol=1e-5)
    assert out2.shape == x2.shape and out2.dtype == x2.dtype

    print("KERNEL_OK")
</pallas_src>

<mosaic_0001>
module attributes {stable_mosaic.version = 11 : i64} {
  func.func @kernel(%arg0: i32, %arg1: memref<8x8x128xf32, #tpu.memory_space<vmem>>, %arg2: memref<128x128xf32, #tpu.memory_space<vmem>>, %arg3: memref<8x8x128xf32, #tpu.memory_space<vmem>>) attributes {dimension_semantics = [#tpu.dimension_semantics<parallel>], iteration_bounds = array<i64: 1>, scalar_prefetch = 0 : i64, scratch_operands = 0 : i64, tpu.core_type = #tpu.core_type<tc>, window_params = [{transform_indices = @transform_0, window_bounds = array<i64: 8, 8, 128>}, {pipeline_mode = #tpu.pipeline_mode<synchronous>, transform_indices = @transform_1, window_bounds = array<i64: 128, 128>}, {transform_indices = @transform_2, window_bounds = array<i64: 8, 8, 128>}]} {
    %c0 = arith.constant 0 : index
    %c0_0 = arith.constant 0 : index
    %c0_1 = arith.constant 0 : index
    %0 = vector.load %arg1[%c0, %c0_0, %c0_1] : memref<8x8x128xf32, #tpu.memory_space<vmem>>, vector<8x8x128xf32>
    %1 = vector.extract_strided_slice %0 {offsets = [0, 0, 0], sizes = [8, 1, 128], strides = [1, 1, 1]} : vector<8x8x128xf32> to vector<8x1x128xf32>
    %2 = vector.extract_strided_slice %0 {offsets = [0, 7, 0], sizes = [8, 1, 128], strides = [1, 1, 1]} : vector<8x8x128xf32> to vector<8x1x128xf32>
    %3 = tpu.concatenate %1, %1, %0, %2, %2 in 1 : vector<8x1x128xf32>, vector<8x1x128xf32>, vector<8x8x128xf32>, vector<8x1x128xf32>, vector<8x1x128xf32> -> vector<8x12x128xf32>
    %4 = vector.extract_strided_slice %3 {offsets = [0, 0, 0], sizes = [8, 8, 128], strides = [1, 1, 1]} : vector<8x12x128xf32> to vector<8x8x128xf32>
    %cst = arith.constant 0.054488685 : f32
    %5 = vector.broadcast %cst : f32 to vector<8x8x128xf32>
    %6 = arith.mulf %5, %4 : vector<8x8x128xf32>
    %7 = vector.extract_strided_slice %3 {offsets = [0, 1, 0], sizes = [8, 8, 128], strides = [1, 1, 1]} : vector<8x12x128xf32> to vector<8x8x128xf32>
    %cst_2 = arith.constant 0.244201347 : f32
    %8 = vector.broadcast %cst_2 : f32 to vector<8x8x128xf32>
    %9 = arith.mulf %8, %7 : vector<8x8x128xf32>
    %10 = arith.addf %6, %9 : vector<8x8x128xf32>
    %11 = vector.extract_strided_slice %3 {offsets = [0, 2, 0], sizes = [8, 8, 128], strides = [1, 1, 1]} : vector<8x12x128xf32> to vector<8x8x128xf32>
    %cst_3 = arith.constant 0.402619958 : f32
    %12 = vector.broadcast %cst_3 : f32 to vector<8x8x128xf32>
    %13 = arith.mulf %12, %11 : vector<8x8x128xf32>
    %14 = arith.addf %10, %13 : vector<8x8x128xf32>
    %15 = vector.extract_strided_slice %3 {offsets = [0, 3, 0], sizes = [8, 8, 128], strides = [1, 1, 1]} : vector<8x12x128xf32> to vector<8x8x128xf32>
    %cst_4 = arith.constant 0.244201347 : f32
    %16 = vector.broadcast %cst_4 : f32 to vector<8x8x128xf32>
    %17 = arith.mulf %16, %15 : vector<8x8x128xf32>
    %18 = arith.addf %14, %17 : vector<8x8x128xf32>
    %19 = vector.extract_strided_slice %3 {offsets = [0, 4, 0], sizes = [8, 8, 128], strides = [1, 1, 1]} : vector<8x12x128xf32> to vector<8x8x128xf32>
    %cst_5 = arith.constant 0.054488685 : f32
    %20 = vector.broadcast %cst_5 : f32 to vector<8x8x128xf32>
    %21 = arith.mulf %20, %19 : vector<8x8x128xf32>
    %22 = arith.addf %18, %21 : vector<8x8x128xf32>
    %23 = vector.shape_cast %22 : vector<8x8x128xf32> to vector<64x128xf32>
    %c0_6 = arith.constant 0 : index
    %c0_7 = arith.constant 0 : index
    %24 = vector.load %arg2[%c0_6, %c0_7] : memref<128x128xf32, #tpu.memory_space<vmem>>, vector<128x128xf32>
    %cst_8 = arith.constant dense<0.000000e+00> : vector<64x128xf32>
    %25 = tpu.matmul %23, %24, %cst_8 {dimension_numbers = #tpu.dot_dimension_numbers<[1], [0], [0], [1], [0, 0, 1, 1], [], []>, precision = #tpu.contract_precision<fp32>} : vector<64x128xf32>, vector<128x128xf32>, vector<64x128xf32> -> vector<64x128xf32>
    %26 = vector.shape_cast %25 : vector<64x128xf32> to vector<8x8x128xf32>
    %c0_9 = arith.constant 0 : index
    %c0_10 = arith.constant 0 : index
    %c0_11 = arith.constant 0 : index
    %27 = vector.load %arg3[%c0_9, %c0_10, %c0_11] : memref<8x8x128xf32, #tpu.memory_space<vmem>>, vector<8x8x128xf32>
    tpu.vector_store %arg3[%c0_9, %c0_10, %c0_11], %26 {strides = array<i32>} : memref<8x8x128xf32, #tpu.memory_space<vmem>>, vector<8x8x128xf32>,
    return
  }
  func.func @transform_0(%arg0: i32) -> (i32, i32, i32) {
    %c0_i32 = arith.constant 0 : i32
    %c0_i32_0 = arith.constant 0 : i32
    %c0_i32_1 = arith.constant 0 : i32
    return %arg0, %c0_i32, %c0_i32_0 : i32, i32, i32
  }
  func.func @transform_1(%arg0: i32) -> (i32, i32) {
    %c0_i32 = arith.constant 0 : i32
    %c0_i32_0 = arith.constant 0 : i32
    %c0_i32_1 = arith.constant 0 : i32
    return %c0_i32, %c0_i32_0 : i32, i32
  }
  func.func @transform_2(%arg0: i32) -> (i32, i32, i32) {
    %c0_i32 = arith.constant 0 : i32
    %c0_i32_0 = arith.constant 0 : i32
    %c0_i32_1 = arith.constant 0 : i32
    return %arg0, %c0_i32, %c0_i32_0 : i32, i32, i32
  }
}

</mosaic_0001>

<llo_original>
// kernel: tpu_custom_call.1
$region0: #{tpu_custom_call.1}
  #allocation0 [shape = 'u32[]', space=smem, size = 0x4, offset = 0x4, fixed_abs, tag = 'smem constant byte address 0x4 - core index']
  #allocation1 [shape = 'u32[144,128]{1,0:T(1,128)}', space=vmem, size = 0x12000, scoped, tag = 'internal scratch']
  %s0 = inlined_call_operand.hbm [shape: f32[8,8,128], index: 0, kind: input, shape index: {}]
  %s1 = inlined_call_operand.hbm [shape: f32[128,128], index: 1, kind: input, shape index: {}]
  %s2 = inlined_call_operand.hbm [shape: f32[8,8,128], index: 2, kind: output, shape index: {}]
  %s3 = sld [smem:[#allocation0]]
  $region26: #{tpu_custom_call.1} parent=0
    _
  %s5 = ssub.s32 1, %s3
  %s6 = scalar_select 0, %s5, %s3
  $region1: #{tpu_custom_call.1} parent=0
    #allocation2 [shape = 'u8[32768]{0}', space=vmem, size = 0x8000, scoped, tag = 'input window, operand 0, single buffered']
    #allocation3 [shape = 's32[1]{0}', space=sflag, size = 0x4, scoped, tag = 'scoped memory for tpu_custom_call.1']
    #allocation4 [shape = 's32[1]{0}', space=sflag, size = 0x4, scoped, tag = 'scoped memory for tpu_custom_call.1']
    #allocation5 [shape = 'u8[65536]{0}', space=vmem, size = 0x10000, scoped, tag = 'input window, operand 1, single buffered']
    #allocation6 [shape = 's32[1]{0}', space=sflag, size = 0x4, scoped, tag = 'scoped memory for tpu_custom_call.1']
    #allocation7 [shape = 'u8[32768]{0}', space=vmem, size = 0x8000, scoped, tag = 'output window, operand 0, single buffered']
    %7 = vsyncpa [#allocation3], 0
    %8 = vsyncpa [#allocation6], 0
    %9 = vsyncpa [#allocation4], 0
    // Predicated region
    $region2: #{tpu_custom_call.1} parent=1 // pred_check
      _
    $region3: #{tpu_custom_call.1} parent=1 // pred_check_branch
      %11 = sbr.rel (0) target = $region5
    $region4: #{tpu_custom_call.1} parent=1 // pred_region
      %s13 = ssub.s32 1024, 1024
      %14 = vsyncadd [#allocation3], %s13
      %s15 = sshll.u32 [#allocation2], 4
      %s16 = int_to_ptr.vmem [resolvable:$true] %s15
      %21 = dma.hbm_to_vmem [thread:$0]  %s0, 1024, %s16, [#allocation3], 128, 128, 8
    $region5: #{tpu_custom_call.1} parent=1 // pred_fallthru
      _
    // Predicated region
    $region6: #{tpu_custom_call.1} parent=1 // pred_check
      _
    $region7: #{tpu_custom_call.1} parent=1 // pred_check_branch
      %23 = sbr.rel (0) target = $region9
    $region8: #{tpu_custom_call.1} parent=1 // pred_region
      %s25 = ssub.s32 2048, 2048
      %26 = vsyncadd [#allocation6], %s25
      %s27 = sshll.u32 [#allocation5], 4
      %s28 = int_to_ptr.vmem [resolvable:$true] %s27
      %33 = dma.hbm_to_vmem [thread:$0]  %s1, 2048, %s28, [#allocation6], 128, 128, 8
    $region9: #{tpu_custom_call.1} parent=1 // pred_fallthru
      _
    // Predicated region
    $region10: #{tpu_custom_call.1} parent=1 // pred_check
      _
    $region11: #{tpu_custom_call.1} parent=1 // pred_check_branch
      %35 = sbr.rel (0) target = $region13
    $region12: #{tpu_custom_call.1} parent=1 // pred_region
      %36 = dma.done [#allocation3], 1024
    $region13: #{tpu_custom_call.1} parent=1 // pred_fallthru
      _
    // Predicated region
    $region14: #{tpu_custom_call.1} parent=1 // pred_check
      _
    $region15: #{tpu_custom_call.1} parent=1 // pred_check_branch
      %38 = sbr.rel (0) target = $region17
    $region16: #{tpu_custom_call.1} parent=1 // pred_region
      %39 = dma.done [#allocation6], 2048
    $region17: #{tpu_custom_call.1} parent=1 // pred_fallthru
      _
    %v40 = vld [vmem:[#allocation2] sm:$0xff]
    %v41 = vld [vmem:[#allocation2 + $0x8] sm:$0xff]
    %v42 = vld [vmem:[#allocation2 + $0x10] sm:$0xff]
    %v43 = vld [vmem:[#allocation2 + $0x18] sm:$0xff]
    %v44 = vld [vmem:[#allocation2 + $0x20] sm:$0xff]
    %v45 = vld [vmem:[#allocation2 + $0x28] sm:$0xff]
    %v46 = vld [vmem:[#allocation2 + $0x30] sm:$0xff]
    %v47 = vld [vmem:[#allocation2 + $0x38] sm:$0xff]
    %v56 = vrot.slane %v40, 7
    %v57 = vrot.slane %v41, 7
    %v58 = vrot.slane %v42, 7
    %v59 = vrot.slane %v43, 7
    %v60 = vrot.slane %v44, 7
    %v61 = vrot.slane %v45, 7
    %v62 = vrot.slane %v46, 7
    %v63 = vrot.slane %v47, 7
    %v72 = vrot.slane %v40, 6
    %v73 = vrot.slane %v41, 6
    %v74 = vrot.slane %v42, 6
    %v75 = vrot.slane %v43, 6
    %v76 = vrot.slane %v44, 6
    %v77 = vrot.slane %v45, 6
    %v78 = vrot.slane %v46, 6
    %v79 = vrot.slane %v47, 6
    %v88 = vrot.slane %v40, 5
    %v89 = vrot.slane %v41, 5
    %v90 = vrot.slane %v42, 5
    %v91 = vrot.slane %v43, 5
    %v92 = vrot.slane %v44, 5
    %v93 = vrot.slane %v45, 5
    %v94 = vrot.slane %v46, 5
    %v95 = vrot.slane %v47, 5
    %v104 = vrot.slane %v40, 4
    %v105 = vrot.slane %v41, 4
    %v106 = vrot.slane %v42, 4
    %v107 = vrot.slane %v43, 4
    %v108 = vrot.slane %v44, 4
    %v109 = vrot.slane %v45, 4
    %v110 = vrot.slane %v46, 4
    %v111 = vrot.slane %v47, 4
    %vm120 = vcmask 1040384
    %v121 = vsel %vm120, %v40, %v56
    %v122 = vsel %vm120, %v41, %v57
    %v123 = vsel %vm120, %v42, %v58
    %v124 = vsel %vm120, %v43, %v59
    %v125 = vsel %vm120, %v44, %v60
    %v126 = vsel %vm120, %v45, %v61
    %v127 = vsel %vm120, %v46, %v62
    %v128 = vsel %vm120, %v47, %v63
    %vm129 = vcmask 1041408
    %v130 = vsel %vm129, %v121, %v72
    %v131 = vsel %vm129, %v122, %v73
    %v132 = vsel %vm129, %v123, %v74
    %v133 = vsel %vm129, %v124, %v75
    %v134 = vsel %vm129, %v125, %v76
    %v135 = vsel %vm129, %v126, %v77
    %v136 = vsel %vm129, %v127, %v78
    %v137 = vsel %vm129, %v128, %v79
    %v138 = vsel %vm129, %v72, %v88
    %v139 = vsel %vm129, %v73, %v89
    %v140 = vsel %vm129, %v74, %v90
    %v141 = vsel %vm129, %v75, %v91
    %v142 = vsel %vm129, %v76, %v92
    %v143 = vsel %vm129, %v77, %v93
    %v144 = vsel %vm129, %v78, %v94
    %v145 = vsel %vm129, %v79, %v95
    %vm146 = vcmask 1042432
    %v147 = vsel %vm146, %v138, %v104
    %v148 = vsel %vm146, %v139, %v105
    %v149 = vsel %vm146, %v140, %v106
    %v150 = vsel %vm146, %v141, %v107
    %v151 = vsel %vm146, %v142, %v108
    %v152 = vsel %vm146, %v143, %v109
    %v153 = vsel %vm146, %v144, %v110
    %v154 = vsel %vm146, %v145, %v111
    %v155 = vmul.f32 %v130, 0.054488685
    %v156 = vmul.f32 %v131, 0.054488685
    %v157 = vmul.f32 %v132, 0.054488685
    %v158 = vmul.f32 %v133, 0.054488685
    %v159 = vmul.f32 %v134, 0.054488685
    %v160 = vmul.f32 %v135, 0.054488685
    %v161 = vmul.f32 %v136, 0.054488685
    %v162 = vmul.f32 %v137, 0.054488685
    %v163 = vmul.f32 %v130, 0.24420135
    %v164 = vmul.f32 %v147, 0.24420135
    %v165 = vmul.f32 %v131, 0.24420135
    %v166 = vmul.f32 %v148, 0.24420135
    %v167 = vmul.f32 %v132, 0.24420135
    %v168 = vmul.f32 %v149, 0.24420135
    %v169 = vmul.f32 %v133, 0.24420135
    %v170 = vmul.f32 %v150, 0.24420135
    %v171 = vmul.f32 %v134, 0.24420135
    %v172 = vmul.f32 %v151, 0.24420135
    %v173 = vmul.f32 %v135, 0.24420135
    %v174 = vmul.f32 %v152, 0.24420135
    %v175 = vmul.f32 %v136, 0.24420135
    %v176 = vmul.f32 %v153, 0.24420135
    %v177 = vmul.f32 %v137, 0.24420135
    %v178 = vmul.f32 %v154, 0.24420135
    %vm195 = vcmask 1046528
    %v196 = vrot.slane %v163, 1
    %v197 = vrot.slane %v164, 1
    %v198 = vsel %vm195, %v196, %v197
    %v199 = vrot.slane %v165, 1
    %v200 = vrot.slane %v166, 1
    %v201 = vsel %vm195, %v199, %v200
    %v202 = vrot.slane %v167, 1
    %v203 = vrot.slane %v168, 1
    %v204 = vsel %vm195, %v202, %v203
    %v205 = vrot.slane %v169, 1
    %v206 = vrot.slane %v170, 1
    %v207 = vsel %vm195, %v205, %v206
    %v208 = vrot.slane %v171, 1
    %v209 = vrot.slane %v172, 1
    %v210 = vsel %vm195, %v208, %v209
    %v211 = vrot.slane %v173, 1
    %v212 = vrot.slane %v174, 1
    %v213 = vsel %vm195, %v211, %v212
    %v214 = vrot.slane %v175, 1
    %v215 = vrot.slane %v176, 1
    %v216 = vsel %vm195, %v214, %v215
    %v217 = vrot.slane %v177, 1
    %v218 = vrot.slane %v178, 1
    %v219 = vsel %vm195, %v217, %v218
    %v228 = vadd.f32 %v155, %v198
    %v229 = vadd.f32 %v156, %v201
    %v230 = vadd.f32 %v157, %v204
    %v231 = vadd.f32 %v158, %v207
    %v232 = vadd.f32 %v159, %v210
    %v233 = vadd.f32 %v160, %v213
    %v234 = vadd.f32 %v161, %v216
    %v235 = vadd.f32 %v162, %v219
    %v236 = vmul.f32 %v130, 0.40261996
    %v237 = vmul.f32 %v147, 0.40261996
    %v238 = vmul.f32 %v131, 0.40261996
    %v239 = vmul.f32 %v148, 0.40261996
    %v240 = vmul.f32 %v132, 0.40261996
    %v241 = vmul.f32 %v149, 0.40261996
    %v242 = vmul.f32 %v133, 0.40261996
    %v243 = vmul.f32 %v150, 0.40261996
    %v244 = vmul.f32 %v134, 0.40261996
    %v245 = vmul.f32 %v151, 0.40261996
    %v246 = vmul.f32 %v135, 0.40261996
    %v247 = vmul.f32 %v152, 0.40261996
    %v248 = vmul.f32 %v136, 0.40261996
    %v249 = vmul.f32 %v153, 0.40261996
    %v250 = vmul.f32 %v137, 0.40261996
    %v251 = vmul.f32 %v154, 0.40261996
    %vm268 = vcmask 1045504
    %v269 = vrot.slane %v236, 2
    %v270 = vrot.slane %v237, 2
    %v271 = vsel %vm268, %v269, %v270
    %v272 = vrot.slane %v238, 2
    %v273 = vrot.slane %v239, 2
    %v274 = vsel %vm268, %v272, %v273
    %v275 = vrot.slane %v240, 2
    %v276 = vrot.slane %v241, 2
    %v277 = vsel %vm268, %v275, %v276
    %v278 = vrot.slane %v242, 2
    %v279 = vrot.slane %v243, 2
    %v280 = vsel %vm268, %v278, %v279
    %v281 = vrot.slane %v244, 2
    %v282 = vrot.slane %v245, 2
    %v283 = vsel %vm268, %v281, %v282
    %v284 = vrot.slane %v246, 2
    %v285 = vrot.slane %v247, 2
    %v286 = vsel %vm268, %v284, %v285
    %v287 = vrot.slane %v248, 2
    %v288 = vrot.slane %v249, 2
    %v289 = vsel %vm268, %v287, %v288
    %v290 = vrot.slane %v250, 2
    %v291 = vrot.slane %v251, 2
    %v292 = vsel %vm268, %v290, %v291
    %v301 = vadd.f32 %v228, %v271
    %v302 = vadd.f32 %v229, %v274
    %v303 = vadd.f32 %v230, %v277
    %v304 = vadd.f32 %v231, %v280
    %v305 = vadd.f32 %v232, %v283
    %v306 = vadd.f32 %v233, %v286
    %v307 = vadd.f32 %v234, %v289
    %v308 = vadd.f32 %v235, %v292
    %vm309 = vcmask 1044480
    %v310 = vrot.slane %v163, 3
    %v311 = vrot.slane %v164, 3
    %v312 = vsel %vm309, %v310, %v311
    %v313 = vrot.slane %v165, 3
    %v314 = vrot.slane %v166, 3
    %v315 = vsel %vm309, %v313, %v314
    %v316 = vrot.slane %v167, 3
    %v317 = vrot.slane %v168, 3
    %v318 = vsel %vm309, %v316, %v317
    %v319 = vrot.slane %v169, 3
    %v320 = vrot.slane %v170, 3
    %v321 = vsel %vm309, %v319, %v320
    %v322 = vrot.slane %v171, 3
    %v323 = vrot.slane %v172, 3
    %v324 = vsel %vm309, %v322, %v323
    %v325 = vrot.slane %v173, 3
    %v326 = vrot.slane %v174, 3
    %v327 = vsel %vm309, %v325, %v326
    %v328 = vrot.slane %v175, 3
    %v329 = vrot.slane %v176, 3
    %v330 = vsel %vm309, %v328, %v329
    %v331 = vrot.slane %v177, 3
    %v332 = vrot.slane %v178, 3
    %v333 = vsel %vm309, %v331, %v332
    %v342 = vadd.f32 %v301, %v312
    %v343 = vadd.f32 %v302, %v315
    %v344 = vadd.f32 %v303, %v318
    %v345 = vadd.f32 %v304, %v321
    %v346 = vadd.f32 %v305, %v324
    %v347 = vadd.f32 %v306, %v327
    %v348 = vadd.f32 %v307, %v330
    %v349 = vadd.f32 %v308, %v333
    %v350 = vmul.f32 %v147, 0.054488685
    %v351 = vmul.f32 %v148, 0.054488685
    %v352 = vmul.f32 %v149, 0.054488685
    %v353 = vmul.f32 %v150, 0.054488685
    %v354 = vmul.f32 %v151, 0.054488685
    %v355 = vmul.f32 %v152, 0.054488685
    %v356 = vmul.f32 %v153, 0.054488685
    %v357 = vmul.f32 %v154, 0.054488685
    %vm374 = vcmask 1043456
    %v375 = vrot.slane %v155, 4
    %v376 = vrot.slane %v350, 4
    %v377 = vsel %vm374, %v375, %v376
    %v378 = vrot.slane %v156, 4
    %v379 = vrot.slane %v351, 4
    %v380 = vsel %vm374, %v378, %v379
    %v381 = vrot.slane %v157, 4
    %v382 = vrot.slane %v352, 4
    %v383 = vsel %vm374, %v381, %v382
    %v384 = vrot.slane %v158, 4
    %v385 = vrot.slane %v353, 4
    %v386 = vsel %vm374, %v384, %v385
    %v387 = vrot.slane %v159, 4
    %v388 = vrot.slane %v354, 4
    %v389 = vsel %vm374, %v387, %v388
    %v390 = vrot.slane %v160, 4
    %v391 = vrot.slane %v355, 4
    %v392 = vsel %vm374, %v390, %v391
    %v393 = vrot.slane %v161, 4
    %v394 = vrot.slane %v356, 4
    %v395 = vsel %vm374, %v393, %v394
    %v396 = vrot.slane %v162, 4
    %v397 = vrot.slane %v357, 4
    %v398 = vsel %vm374, %v396, %v397
    %v407 = vadd.f32 %v342, %v377
    %v408 = vadd.f32 %v343, %v380
    %v409 = vadd.f32 %v344, %v383
    %v410 = vadd.f32 %v345, %v386
    %v411 = vadd.f32 %v346, %v389
    %v412 = vadd.f32 %v347, %v392
    %v413 = vadd.f32 %v348, %v395
    %v414 = vadd.f32 %v349, %v398
    %v415 = vld [vmem:[#allocation5] sm:$0xff]
    %v416 = vld [vmem:[#allocation5 + $0x8] sm:$0xff]
    %v417 = vld [vmem:[#allocation5 + $0x10] sm:$0xff]
    %v418 = vld [vmem:[#allocation5 + $0x18] sm:$0xff]
    %v419 = vld [vmem:[#allocation5 + $0x20] sm:$0xff]
    %v420 = vld [vmem:[#allocation5 + $0x28] sm:$0xff]
    %v421 = vld [vmem:[#allocation5 + $0x30] sm:$0xff]
    %v422 = vld [vmem:[#allocation5 + $0x38] sm:$0xff]
    %v423 = vld [vmem:[#allocation5 + $0x40] sm:$0xff]
    %v424 = vld [vmem:[#allocation5 + $0x48] sm:$0xff]
    %v425 = vld [vmem:[#allocation5 + $0x50] sm:$0xff]
    %v426 = vld [vmem:[#allocation5 + $0x58] sm:$0xff]
    %v427 = vld [vmem:[#allocation5 + $0x60] sm:$0xff]
    %v428 = vld [vmem:[#allocation5 + $0x68] sm:$0xff]
    %v429 = vld [vmem:[#allocation5 + $0x70] sm:$0xff]
    %v430 = vld [vmem:[#allocation5 + $0x78] sm:$0xff]
    %431 = vmatprep.subr.mxu0 0.0
    %v432 = vand.u32 %v415, 4294901760
    %433 = vmatpush1.msra.mxu0 %v432
    %434 = vmatprep.subr.mxu0 0.0
    %v435 = vand.u32 %v416, 4294901760
    %436 = vmatpush1.msra.mxu0 %v435
    %437 = vmatprep.subr.mxu0 0.0
    %v438 = vand.u32 %v417, 4294901760
    %439 = vmatpush1.msra.mxu0 %v438
    %440 = vmatprep.subr.mxu0 0.0
    %v441 = vand.u32 %v418, 4294901760
    %442 = vmatpush1.msra.mxu0 %v441
    %443 = vmatprep.subr.mxu0 0.0
    %v444 = vand.u32 %v419, 4294901760
    %445 = vmatpush1.msra.mxu0 %v444
    %446 = vmatprep.subr.mxu0 0.0
    %v447 = vand.u32 %v420, 4294901760
    %448 = vmatpush1.msra.mxu0 %v447
    %449 = vmatprep.subr.mxu0 0.0
    %v450 = vand.u32 %v421, 4294901760
    %451 = vmatpush1.msra.mxu0 %v450
    %452 = vmatprep.subr.mxu0 0.0
    %v453 = vand.u32 %v422, 4294901760
    %454 = vmatpush1.msra.mxu0 %v453
    %455 = vmatprep.subr.mxu0 0.0
    %v456 = vand.u32 %v423, 4294901760
    %457 = vmatpush1.msra.mxu0 %v456
    %458 = vmatprep.subr.mxu0 0.0
    %v459 = vand.u32 %v424, 4294901760
    %460 = vmatpush1.msra.mxu0 %v459
    %461 = vmatprep.subr.mxu0 0.0
    %v462 = vand.u32 %v425, 4294901760
    %463 = vmatpush1.msra.mxu0 %v462
    %464 = vmatprep.subr.mxu0 0.0
    %v465 = vand.u32 %v426, 4294901760
    %466 = vmatpush1.msra.mxu0 %v465
    %467 = vmatprep.subr.mxu0 0.0
    %v468 = vand.u32 %v427, 4294901760
    %469 = vmatpush1.msra.mxu0 %v468
    %470 = vmatprep.subr.mxu0 0.0
    %v471 = vand.u32 %v428, 4294901760
    %472 = vmatpush1.msra.mxu0 %v471
    %473 = vmatprep.subr.mxu0 0.0
    %v474 = vand.u32 %v429, 4294901760
    %475 = vmatpush1.msra.mxu0 %v474
    %476 = vmatprep.subr.mxu0 0.0
    %v477 = vand.u32 %v430, 4294901760
    %478 = vmatpush1.msra.mxu0 %v477
    %479 = vmatprep.subr.mxu0 0.0
    %480 = vmatpush1.msra.mxu0 0.0
    %481 = vmatprep.subr.mxu0 0.0
    %482 = vmatpush1.msra.mxu0 0.0
    %483 = vmatprep.subr.mxu0 0.0
    %484 = vmatpush1.msra.mxu0 0.0
    %485 = vmatprep.subr.mxu0 0.0
    %486 = vmatpush1.msra.mxu0 0.0
    %487 = vmatprep.subr.mxu0 0.0
    %488 = vmatpush1.msra.mxu0 0.0
    %489 = vmatprep.subr.mxu0 0.0
    %490 = vmatpush1.msra.mxu0 0.0
    %491 = vmatprep.subr.mxu0 0.0
    %492 = vmatpush1.msra.mxu0 0.0
    %493 = vmatprep.subr.mxu0 0.0
    %494 = vmatpush1.msra.mxu0 0.0
    %495 = vmatprep.subr.mxu0 0.0
    %496 = vmatpush1.msra.mxu0 0.0
    %497 = vmatprep.subr.mxu0 0.0
    %498 = vmatpush1.msra.mxu0 0.0
    %499 = vmatprep.subr.mxu0 0.0
    %500 = vmatpush1.msra.mxu0 0.0
    %501 = vmatprep.subr.mxu0 0.0
    %502 = vmatpush1.msra.mxu0 0.0
    %503 = vmatprep.subr.mxu0 0.0
    %504 = vmatpush1.msra.mxu0 0.0
    %505 = vmatprep.subr.mxu0 0.0
    %506 = vmatpush1.msra.mxu0 0.0
    %507 = vmatprep.subr.mxu0 0.0
    %508 = vmatpush1.msra.mxu0 0.0
    %509 = vmatprep.subr.mxu0 0.0
    %510 = vmatpush1.msra.mxu0 0.0
    %511 = vmatprep.mubr.f32.mxu0 0.0
    %v512 = vand.u32 %v407, 4294901760
    %v513 = vsub.f32 %v407, %v512
    %v514 = vand.u32 %v513, 4294901760
    %v515 = vsub.f32 %v513, %v514
    %v516 = vand.u32 %v515, 4294901760
    %517 = vmatmul.mubr.f32.gmra.mrb[0].mxu0 %v516
    %v518 = vpop.f32.mrb[0].mxu0
    %v519 = vadd.f32 0.0, %v518
    %v520 = vpop.f32.mrb[0].mxu0
    %521 = vmatprep.mubr.f32.mxu0 0.0
    %v522 = vand.u32 %v408, 4294901760
    %v523 = vsub.f32 %v408, %v522
    %v524 = vand.u32 %v523, 4294901760
    %v525 = vsub.f32 %v523, %v524
    %v526 = vand.u32 %v525, 4294901760
    %527 = vmatmul.mubr.f32.gmra.mrb[0].mxu0 %v526
    %v528 = vpop.f32.mrb[0].mxu0
    %v529 = vadd.f32 0.0, %v528
    %v530 = vpop.f32.mrb[0].mxu0
    %531 = vmatprep.mubr.f32.mxu0 0.0
    %v532 = vand.u32 %v409, 4294901760
    %v533 = vsub.f32 %v409, %v532
    %v534 = vand.u32 %v533, 4294901760
    %v535 = vsub.f32 %v533, %v534
    %v536 = vand.u32 %v535, 4294901760
    %537 = vmatmul.mubr.f32.gmra.mrb[0].mxu0 %v536
    %v538 = vpop.f32.mrb[0].mxu0
    %v539 = vadd.f32 0.0, %v538
    %v540 = vpop.f32.mrb[0].mxu0
    %541 = vmatprep.mubr.f32.mxu0 0.0
    %v542 = vand.u32 %v410, 4294901760
    %v543 = vsub.f32 %v410, %v542
    %v544 = vand.u32 %v543, 4294901760
    %v545 = vsub.f32 %v543, %v544
    %v546 = vand.u32 %v545, 4294901760
    %547 = vmatmul.mubr.f32.gmra.mrb[0].mxu0 %v546
    %v548 = vpop.f32.mrb[0].mxu0
    %v549 = vadd.f32 0.0, %v548
    %v550 = vpop.f32.mrb[0].mxu0
    %551 = vmatprep.mubr.f32.mxu0 0.0
    %v552 = vand.u32 %v411, 4294901760
    %v553 = vsub.f32 %v411, %v552
    %v554 = vand.u32 %v553, 4294901760
    %v555 = vsub.f32 %v553, %v554
    %v556 = vand.u32 %v555, 4294901760
    %557 = vmatmul.mubr.f32.gmra.mrb[0].mxu0 %v556
    %v558 = vpop.f32.mrb[0].mxu0
    %v559 = vadd.f32 0.0, %v558
    %v560 = vpop.f32.mrb[0].mxu0
    %561 = vmatprep.mubr.f32.mxu0 0.0
    %v562 = vand.u32 %v412, 4294901760
    %v563 = vsub.f32 %v412, %v562
    %v564 = vand.u32 %v563, 4294901760
    %v565 = vsub.f32 %v563, %v564
    %v566 = vand.u32 %v565, 4294901760
    %567 = vmatmul.mubr.f32.gmra.mrb[0].mxu0 %v566
    %v568 = vpop.f32.mrb[0].mxu0
    %v569 = vadd.f32 0.0, %v568
    %v570 = vpop.f32.mrb[0].mxu0
    %571 = vmatprep.mubr.f32.mxu0 0.0
    %v572 = vand.u32 %v413, 4294901760
    %v573 = vsub.f32 %v413, %v572
    %v574 = vand.u32 %v573, 4294901760
    %v575 = vsub.f32 %v573, %v574
    %v576 = vand.u32 %v575, 4294901760
    %577 = vmatmul.mubr.f32.gmra.mrb[0].mxu0 %v576
    %v578 = vpop.f32.mrb[0].mxu0
    %v579 = vadd.f32 0.0, %v578
    %v580 = vpop.f32.mrb[0].mxu0
    %581 = vmatprep.mubr.f32.mxu0 0.0
    %v582 = vand.u32 %v414, 4294901760
    %v583 = vsub.f32 %v414, %v582
    %v584 = vand.u32 %v583, 4294901760
    %v585 = vsub.f32 %v583, %v584
    %v586 = vand.u32 %v585, 4294901760
    %587 = vmatmul.mubr.f32.gmra.mrb[0].mxu0 %v586
    %v588 = vpop.f32.mrb[0].mxu0
    %v589 = vadd.f32 0.0, %v588
    %v590 = vpop.f32.mrb[0].mxu0
    %591 = vdwg.mxu0
    %592 = vmatprep.subr.mxu0 0.0
    %v593 = vand.u32 %v415, 4294901760
    %v594 = vsub.f32 %v415, %v593
    %v595 = vand.u32 %v594, 4294901760
    %v596 = vsub.f32 %v594, %v595
    %v597 = vand.u32 %v596, 4294901760
    %598 = vmatpush1.msra.mxu0 %v597
    %599 = vmatprep.subr.mxu0 0.0
    %v600 = vand.u32 %v416, 4294901760
    %v601 = vsub.f32 %v416, %v600
    %v602 = vand.u32 %v601, 4294901760
    %v603 = vsub.f32 %v601, %v602
    %v604 = vand.u32 %v603, 4294901760
    %605 = vmatpush1.msra.mxu0 %v604
    %606 = vmatprep.subr.mxu0 0.0
    %v607 = vand.u32 %v417, 4294901760
    %v608 = vsub.f32 %v417, %v607
    %v609 = vand.u32 %v608, 4294901760
    %v610 = vsub.f32 %v608, %v609
    %v611 = vand.u32 %v610, 4294901760
    %612 = vmatpush1.msra.mxu0 %v611
    %613 = vmatprep.subr.mxu0 0.0
    %v614 = vand.u32 %v418, 4294901760
    %v615 = vsub.f32 %v418, %v614
    %v616 = vand.u32 %v615, 4294901760
    %v617 = vsub.f32 %v615, %v616
    %v618 = vand.u32 %v617, 4294901760
    %619 = vmatpush1.msra.mxu0 %v618
    %620 = vmatprep.subr.mxu0 0.0
    %v621 = vand.u32 %v419, 4294901760
    %v622 = vsub.f32 %v419, %v621
    %v623 = vand.u32 %v622, 4294901760
    %v624 = vsub.f32 %v622, %v623
    %v625 = vand.u32 %v624, 4294901760
    %626 = vmatpush1.msra.mxu0 %v625
    %627 = vmatprep.subr.mxu0 0.0
    %v628 = vand.u32 %v420, 4294901760
    %v629 = vsub.f32 %v420, %v628
    %v630 = vand.u32 %v629, 4294901760
    %v631 = vsub.f32 %v629, %v630
    %v632 = vand.u32 %v631, 4294901760
    %633 = vmatpush1.msra.mxu0 %v632
    %634 = vmatprep.subr.mxu0 0.0
    %v635 = vand.u32 %v421, 4294901760
    %v636 = vsub.f32 %v421, %v635
    %v637 = vand.u32 %v636, 4294901760
    %v638 = vsub.f32 %v636, %v637
    %v639 = vand.u32 %v638, 4294901760
    %640 = vmatpush1.msra.mxu0 %v639
    %641 = vmatprep.subr.mxu0 0.0
    %v642 = vand.u32 %v422, 4294901760
    %v643 = vsub.f32 %v422, %v642
    %v644 = vand.u32 %v643, 4294901760
    %v645 = vsub.f32 %v643, %v644
    %v646 = vand.u32 %v645, 4294901760
    %647 = vmatpush1.msra.mxu0 %v646
    %648 = vmatprep.subr.mxu0 0.0
    %v649 = vand.u32 %v423, 4294901760
    %v650 = vsub.f32 %v423, %v649
    %v651 = vand.u32 %v650, 4294901760
    %v652 = vsub.f32 %v650, %v651
    %v653 = vand.u32 %v652, 4294901760
    %654 = vmatpush1.msra.mxu0 %v653
    %655 = vmatprep.subr.mxu0 0.0
    %v656 = vand.u32 %v424, 4294901760
    %v657 = vsub.f32 %v424, %v656
    %v658 = vand.u32 %v657, 4294901760
    %v659 = vsub.f32 %v657, %v658
    %v660 = vand.u32 %v659, 4294901760
    %661 = vmatpush1.msra.mxu0 %v660
    %662 = vmatprep.subr.mxu0 0.0
    %v663 = vand.u32 %v425, 4294901760
    %v664 = vsub.f32 %v425, %v663
    %v665 = vand.u32 %v664, 4294901760
    %v666 = vsub.f32 %v664, %v665
    %v667 = vand.u32 %v666, 4294901760
    %668 = vmatpush1.msra.mxu0 %v667
    %669 = vmatprep.subr.mxu0 0.0
    %v670 = vand.u32 %v426, 4294901760
    %v671 = vsub.f32 %v426, %v670
    %v672 = vand.u32 %v671, 4294901760
    %v673 = vsub.f32 %v671, %v672
    %v674 = vand.u32 %v673, 4294901760
    %675 = vmatpush1.msra.mxu0 %v674
    %676 = vmatprep.subr.mxu0 0.0
    %v677 = vand.u32 %v427, 4294901760
    %v678 = vsub.f32 %v427, %v677
    %v679 = vand.u32 %v678, 4294901760
    %v680 = vsub.f32 %v678, %v679
    %v681 = vand.u32 %v680, 4294901760
    %682 = vmatpush1.msra.mxu0 %v681
    %683 = vmatprep.subr.mxu0 0.0
    %v684 = vand.u32 %v428, 4294901760
    %v685 = vsub.f32 %v428, %v684
    %v686 = vand.u32 %v685, 4294901760
    %v687 = vsub.f32 %v685, %v686
    %v688 = vand.u32 %v687, 4294901760
    %689 = vmatpush1.msra.mxu0 %v688
    %690 = vmatprep.subr.mxu0 0.0
    %v691 = vand.u32 %v429, 4294901760
    %v692 = vsub.f32 %v429, %v691
    %v693 = vand.u32 %v692, 4294901760
    %v694 = vsub.f32 %v692, %v693
    %v695 = vand.u32 %v694, 4294901760
    %696 = vmatpush1.msra.mxu0 %v695
    %697 = vmatprep.subr.mxu0 0.0
    %v698 = vand.u32 %v430, 4294901760
    %v699 = vsub.f32 %v430, %v698
    %v700 = vand.u32 %v699, 4294901760
    %v701 = vsub.f32 %v699, %v700
    %v702 = vand.u32 %v701, 4294901760
    %703 = vmatpush1.msra.mxu0 %v702
    %704 = vmatprep.subr.mxu0 0.0
    %705 = vmatpush1.msra.mxu0 0.0
    %706 = vmatprep.subr.mxu0 0.0
    %707 = vmatpush1.msra.mxu0 0.0
    %708 = vmatprep.subr.mxu0 0.0
    %709 = vmatpush1.msra.mxu0 0.0
    %710 = vmatprep.subr.mxu0 0.0
    %711 = vmatpush1.msra.mxu0 0.0
    %712 = vmatprep.subr.mxu0 0.0
    %713 = vmatpush1.msra.mxu0 0.0
    %714 = vmatprep.subr.mxu0 0.0
    %715 = vmatpush1.msra.mxu0 0.0
    %716 = vmatprep.subr.mxu0 0.0
    %717 = vmatpush1.msra.mxu0 0.0
    %718 = vmatprep.subr.mxu0 0.0
    %719 = vmatpush1.msra.mxu0 0.0
    %720 = vmatprep.subr.mxu0 0.0
    %721 = vmatpush1.msra.mxu0 0.0
    %722 = vmatprep.subr.mxu0 0.0
    %723 = vmatpush1.msra.mxu0 0.0
    %724 = vmatprep.subr.mxu0 0.0
    %725 = vmatpush1.msra.mxu0 0.0
    %726 = vmatprep.subr.mxu0 0.0
    %727 = vmatpush1.msra.mxu0 0.0
    %728 = vmatprep.subr.mxu0 0.0
    %729 = vmatpush1.msra.mxu0 0.0
    %730 = vmatprep.subr.mxu0 0.0
    %731 = vmatpush1.msra.mxu0 0.0
    %732 = vmatprep.subr.mxu0 0.0
    %733 = vmatpush1.msra.mxu0 0.0
    %734 = vmatprep.subr.mxu0 0.0
    %735 = vmatpush1.msra.mxu0 0.0
    %736 = vmatprep.mubr.f32.mxu0 0.0
    %v737 = vand.u32 %v407, 4294901760
    %738 = vmatmul.mubr.f32.gmra.mrb[0].mxu0 %v737
    %v739 = vpop.f32.mrb[0].mxu0
    %v740 = vadd.f32 %v519, %v739
    %v741 = vpop.f32.mrb[0].mxu0
    %742 = vmatprep.mubr.f32.mxu0 0.0
    %v743 = vand.u32 %v408, 4294901760
    %744 = vmatmul.mubr.f32.gmra.mrb[0].mxu0 %v743
    %v745 = vpop.f32.mrb[0].mxu0
    %v746 = vadd.f32 %v529, %v745
    %v747 = vpop.f32.mrb[0].mxu0
    %748 = vmatprep.mubr.f32.mxu0 0.0
    %v749 = vand.u32 %v409, 4294901760
    %750 = vmatmul.mubr.f32.gmra.mrb[0].mxu0 %v749
    %v751 = vpop.f32.mrb[0].mxu0
    %v752 = vadd.f32 %v539, %v751
    %v753 = vpop.f32.mrb[0].mxu0
    %754 = vmatprep.mubr.f32.mxu0 0.0
    %v755 = vand.u32 %v410, 4294901760
    %756 = vmatmul.mubr.f32.gmra.mrb[0].mxu0 %v755
    %v757 = vpop.f32.mrb[0].mxu0
    %v758 = vadd.f32 %v549, %v757
    %v759 = vpop.f32.mrb[0].mxu0
    %760 = vmatprep.mubr.f32.mxu0 0.0
    %v761 = vand.u32 %v411, 4294901760
    %762 = vmatmul.mubr.f32.gmra.mrb[0].mxu0 %v761
    %v763 = vpop.f32.mrb[0].mxu0
    %v764 = vadd.f32 %v559, %v763
    %v765 = vpop.f32.mrb[0].mxu0
    %766 = vmatprep.mubr.f32.mxu0 0.0
    %v767 = vand.u32 %v412, 4294901760
    %768 = vmatmul.mubr.f32.gmra.mrb[0].mxu0 %v767
    %v769 = vpop.f32.mrb[0].mxu0
    %v770 = vadd.f32 %v569, %v769
    %v771 = vpop.f32.mrb[0].mxu0
    %772 = vmatprep.mubr.f32.mxu0 0.0
    %v773 = vand.u32 %v413, 4294901760
    %774 = vmatmul.mubr.f32.gmra.mrb[0].mxu0 %v773
    %v775 = vpop.f32.mrb[0].mxu0
    %v776 = vadd.f32 %v579, %v775
    %v777 = vpop.f32.mrb[0].mxu0
    %778 = vmatprep.mubr.f32.mxu0 0.0
    %v779 = vand.u32 %v414, 4294901760
    %780 = vmatmul.mubr.f32.gmra.mrb[0].mxu0 %v779
    %v781 = vpop.f32.mrb[0].mxu0
    %v782 = vadd.f32 %v589, %v781
    %v783 = vpop.f32.mrb[0].mxu0
    %784 = vdwg.mxu0
    %785 = vmatprep.subr.mxu0 0.0
    %v786 = vand.u32 %v415, 4294901760
    %v787 = vsub.f32 %v415, %v786
    %788 = vmatpush1.msra.mxu0 %v787
    %789 = vmatprep.subr.mxu0 0.0
    %v790 = vand.u32 %v416, 4294901760
    %v791 = vsub.f32 %v416, %v790
    %792 = vmatpush1.msra.mxu0 %v791
    %793 = vmatprep.subr.mxu0 0.0
    %v794 = vand.u32 %v417, 4294901760
    %v795 = vsub.f32 %v417, %v794
    %796 = vmatpush1.msra.mxu0 %v795
    %797 = vmatprep.subr.mxu0 0.0
    %v798 = vand.u32 %v418, 4294901760
    %v799 = vsub.f32 %v418, %v798
    %800 = vmatpush1.msra.mxu0 %v799
    %801 = vmatprep.subr.mxu0 0.0
    %v802 = vand.u32 %v419, 4294901760
    %v803 = vsub.f32 %v419, %v802
    %804 = vmatpush1.msra.mxu0 %v803
    %805 = vmatprep.subr.mxu0 0.0
    %v806 = vand.u32 %v420, 4294901760
    %v807 = vsub.f32 %v420, %v806
    %808 = vmatpush1.msra.mxu0 %v807
    %809 = vmatprep.subr.mxu0 0.0
    %v810 = vand.u32 %v421, 4294901760
    %v811 = vsub.f32 %v421, %v810
    %812 = vmatpush1.msra.mxu0 %v811
    %813 = vmatprep.subr.mxu0 0.0
    %v814 = vand.u32 %v422, 4294901760
    %v815 = vsub.f32 %v422, %v814
    %816 = vmatpush1.msra.mxu0 %v815
    %817 = vmatprep.subr.mxu0 0.0
    %v818 = vand.u32 %v423, 4294901760
    %v819 = vsub.f32 %v423, %v818
    %820 = vmatpush1.msra.mxu0 %v819
    %821 = vmatprep.subr.mxu0 0.0
    %v822 = vand.u32 %v424, 4294901760
    %v823 = vsub.f32 %v424, %v822
    %824 = vmatpush1.msra.mxu0 %v823
    %825 = vmatprep.subr.mxu0 0.0
    %v826 = vand.u32 %v425, 4294901760
    %v827 = vsub.f32 %v425, %v826
    %828 = vmatpush1.msra.mxu0 %v827
    %829 = vmatprep.subr.mxu0 0.0
    %v830 = vand.u32 %v426, 4294901760
    %v831 = vsub.f32 %v426, %v830
    %832 = vmatpush1.msra.mxu0 %v831
    %833 = vmatprep.subr.mxu0 0.0
    %v834 = vand.u32 %v427, 4294901760
    %v835 = vsub.f32 %v427, %v834
    %836 = vmatpush1.msra.mxu0 %v835
    %837 = vmatprep.subr.mxu0 0.0
    %v838 = vand.u32 %v428, 4294901760
    %v839 = vsub.f32 %v428, %v838
    %840 = vmatpush1.msra.mxu0 %v839
    %841 = vmatprep.subr.mxu0 0.0
    %v842 = vand.u32 %v429, 4294901760
    %v843 = vsub.f32 %v429, %v842
    %844 = vmatpush1.msra.mxu0 %v843
    %845 = vmatprep.subr.mxu0 0.0
    %v846 = vand.u32 %v430, 4294901760
    %v847 = vsub.f32 %v430, %v846
    %848 = vmatpush1.msra.mxu0 %v847
    %849 = vmatprep.subr.mxu0 0.0
    %850 = vmatpush1.msra.mxu0 0.0
    %851 = vmatprep.subr.mxu0 0.0
    %852 = vmatpush1.msra.mxu0 0.0
    %853 = vmatprep.subr.mxu0 0.0
    %854 = vmatpush1.msra.mxu0 0.0
    %855 = vmatprep.subr.mxu0 0.0
    %856 = vmatpush1.msra.mxu0 0.0
    %857 = vmatprep.subr.mxu0 0.0
    %858 = vmatpush1.msra.mxu0 0.0
    %859 = vmatprep.subr.mxu0 0.0
    %860 = vmatpush1.msra.mxu0 0.0
    %861 = vmatprep.subr.mxu0 0.0
    %862 = vmatpush1.msra.mxu0 0.0
    %863 = vmatprep.subr.mxu0 0.0
    %864 = vmatpush1.msra.mxu0 0.0
    %865 = vmatprep.subr.mxu0 0.0
    %866 = vmatpush1.msra.mxu0 0.0
    %867 = vmatprep.subr.mxu0 0.0
    %868 = vmatpush1.msra.mxu0 0.0
    %869 = vmatprep.subr.mxu0 0.0
    %870 = vmatpush1.msra.mxu0 0.0
    %871 = vmatprep.subr.mxu0 0.0
    %872 = vmatpush1.msra.mxu0 0.0
    %873 = vmatprep.subr.mxu0 0.0
    %874 = vmatpush1.msra.mxu0 0.0
    %875 = vmatprep.subr.mxu0 0.0
    %876 = vmatpush1.msra.mxu0 0.0
    %877 = vmatprep.subr.mxu0 0.0
    %878 = vmatpush1.msra.mxu0 0.0
    %879 = vmatprep.subr.mxu0 0.0
    %880 = vmatpush1.msra.mxu0 0.0
    %881 = vmatprep.mubr.f32.mxu0 0.0
    %v882 = vand.u32 %v407, 4294901760
    %v883 = vsub.f32 %v407, %v882
    %884 = vmatmul.mubr.f32.gmra.mrb[0].mxu0 %v883
    %v885 = vpop.f32.mrb[0].mxu0
    %v886 = vadd.f32 %v740, %v885
    %v887 = vpop.f32.mrb[0].mxu0
    %888 = vmatprep.mubr.f32.mxu0 0.0
    %v889 = vand.u32 %v408, 4294901760
    %v890 = vsub.f32 %v408, %v889
    %891 = vmatmul.mubr.f32.gmra.mrb[0].mxu0 %v890
    %v892 = vpop.f32.mrb[0].mxu0
    %v893 = vadd.f32 %v746, %v892
    %v894 = vpop.f32.mrb[0].mxu0
    %895 = vmatprep.mubr.f32.mxu0 0.0
    %v896 = vand.u32 %v409, 4294901760
    %v897 = vsub.f32 %v409, %v896
    %898 = vmatmul.mubr.f32.gmra.mrb[0].mxu0 %v897
    %v899 = vpop.f32.mrb[0].mxu0
    %v900 = vadd.f32 %v752, %v899
    %v901 = vpop.f32.mrb[0].mxu0
    %902 = vmatprep.mubr.f32.mxu0 0.0
    %v903 = vand.u32 %v410, 4294901760
    %v904 = vsub.f32 %v410, %v903
    %905 = vmatmul.mubr.f32.gmra.mrb[0].mxu0 %v904
    %v906 = vpop.f32.mrb[0].mxu0
    %v907 = vadd.f32 %v758, %v906
    %v908 = vpop.f32.mrb[0].mxu0
    %909 = vmatprep.mubr.f32.mxu0 0.0
    %v910 = vand.u32 %v411, 4294901760
    %v911 = vsub.f32 %v411, %v910
    %912 = vmatmul.mubr.f32.gmra.mrb[0].mxu0 %v911
    %v913 = vpop.f32.mrb[0].mxu0
    %v914 = vadd.f32 %v764, %v913
    %v915 = vpop.f32.mrb[0].mxu0
    %916 = vmatprep.mubr.f32.mxu0 0.0
    %v917 = vand.u32 %v412, 4294901760
    %v918 = vsub.f32 %v412, %v917
    %919 = vmatmul.mubr.f32.gmra.mrb[0].mxu0 %v918
    %v920 = vpop.f32.mrb[0].mxu0
    %v921 = vadd.f32 %v770, %v920
    %v922 = vpop.f32.mrb[0].mxu0
    %923 = vmatprep.mubr.f32.mxu0 0.0
    %v924 = vand.u32 %v413, 4294901760
    %v925 = vsub.f32 %v413, %v924
    %926 = vmatmul.mubr.f32.gmra.mrb[0].mxu0 %v925
    %v927 = vpop.f32.mrb[0].mxu0
    %v928 = vadd.f32 %v776, %v927
    %v929 = vpop.f32.mrb[0].mxu0
    %930 = vmatprep.mubr.f32.mxu0 0.0
    %v931 = vand.u32 %v414, 4294901760
    %v932 = vsub.f32 %v414, %v931
    %933 = vmatmul.mubr.f32.gmra.mrb[0].mxu0 %v932
    %v934 = vpop.f32.mrb[0].mxu0
    %v935 = vadd.f32 %v782, %v934
    %v936 = vpop.f32.mrb[0].mxu0
    %937 = vdwg.mxu0
    %938 = vmatprep.subr.mxu0 0.0
    %v939 = vand.u32 %v415, 4294901760
    %940 = vmatpush1.msra.mxu0 %v939
    %941 = vmatprep.subr.mxu0 0.0
    %v942 = vand.u32 %v416, 4294901760
    %943 = vmatpush1.msra.mxu0 %v942
    %944 = vmatprep.subr.mxu0 0.0
    %v945 = vand.u32 %v417, 4294901760
    %946 = vmatpush1.msra.mxu0 %v945
    %947 = vmatprep.subr.mxu0 0.0
    %v948 = vand.u32 %v418, 4294901760
    %949 = vmatpush1.msra.mxu0 %v948
    %950 = vmatprep.subr.mxu0 0.0
    %v951 = vand.u32 %v419, 4294901760
    %952 = vmatpush1.msra.mxu0 %v951
    %953 = vmatprep.subr.mxu0 0.0
    %v954 = vand.u32 %v420, 4294901760
    %955 = vmatpush1.msra.mxu0 %v954
    %956 = vmatprep.subr.mxu0 0.0
    %v957 = vand.u32 %v421, 4294901760
    %958 = vmatpush1.msra.mxu0 %v957
    %959 = vmatprep.subr.mxu0 0.0
    %v960 = vand.u32 %v422, 4294901760
    %961 = vmatpush1.msra.mxu0 %v960
    %962 = vmatprep.subr.mxu0 0.0
    %v963 = vand.u32 %v423, 4294901760
    %964 = vmatpush1.msra.mxu0 %v963
    %965 = vmatprep.subr.mxu0 0.0
    %v966 = vand.u32 %v424, 4294901760
    %967 = vmatpush1.msra.mxu0 %v966
    %968 = vmatprep.subr.mxu0 0.0
    %v969 = vand.u32 %v425, 4294901760
    %970 = vmatpush1.msra.mxu0 %v969
    %971 = vmatprep.subr.mxu0 0.0
    %v972 = vand.u32 %v426, 4294901760
    %973 = vmatpush1.msra.mxu0 %v972
    %974 = vmatprep.subr.mxu0 0.0
    %v975 = vand.u32 %v427, 4294901760
    %976 = vmatpush1.msra.mxu0 %v975
    %977 = vmatprep.subr.mxu0 0.0
    %v978 = vand.u32 %v428, 4294901760
    %979 = vmatpush1.msra.mxu0 %v978
    %980 = vmatprep.subr.mxu0 0.0
    %v981 = vand.u32 %v429, 4294901760
    %982 = vmatpush1.msra.mxu0 %v981
    %983 = vmatprep.subr.mxu0 0.0
    %v984 = vand.u32 %v430, 4294901760
    %985 = vmatpush1.msra.mxu0 %v984
    %986 = vmatprep.subr.mxu0 0.0
    %987 = vmatpush1.msra.mxu0 0.0
    %988 = vmatprep.subr.mxu0 0.0
    %989 = vmatpush1.msra.mxu0 0.0
    %990 = vmatprep.subr.mxu0 0.0
    %991 = vmatpush1.msra.mxu0 0.0
    %992 = vmatprep.subr.mxu0 0.0
    %993 = vmatpush1.msra.mxu0 0.0
    %994 = vmatprep.subr.mxu0 0.0
    %995 = vmatpush1.msra.mxu0 0.0
    %996 = vmatprep.subr.mxu0 0.0
    %997 = vmatpush1.msra.mxu0 0.0
    %998 = vmatprep.subr.mxu0 0.0
    %999 = vmatpush1.msra.mxu0 0.0
    %1000 = vmatprep.subr.mxu0 0.0
    %1001 = vmatpush1.msra.mxu0 0.0
    %1002 = vmatprep.subr.mxu0 0.0
    %1003 = vmatpush1.msra.mxu0 0.0
    %1004 = vmatprep.subr.mxu0 0.0
    %1005 = vmatpush1.msra.mxu0 0.0
    %1006 = vmatprep.subr.mxu0 0.0
    %1007 = vmatpush1.msra.mxu0 0.0
    %1008 = vmatprep.subr.mxu0 0.0
    %1009 = vmatpush1.msra.mxu0 0.0
    %1010 = vmatprep.subr.mxu0 0.0
    %1011 = vmatpush1.msra.mxu0 0.0
    %1012 = vmatprep.subr.mxu0 0.0
    %1013 = vmatpush1.msra.mxu0 0.0
    %1014 = vmatprep.subr.mxu0 0.0
    %1015 = vmatpush1.msra.mxu0 0.0
    %1016 = vmatprep.subr.mxu0 0.0
    %1017 = vmatpush1.msra.mxu0 0.0
    %1018 = vmatprep.mubr.f32.mxu0 0.0
    %v1019 = vand.u32 %v407, 4294901760
    %v1020 = vsub.f32 %v407, %v1019
    %v1021 = vand.u32 %v1020, 4294901760
    %1022 = vmatmul.mubr.f32.gmra.mrb[0].mxu0 %v1021
    %v1023 = vpop.f32.mrb[0].mxu0
    %v1024 = vadd.f32 %v886, %v1023
    %v1025 = vpop.f32.mrb[0].mxu0
    %1026 = vmatprep.mubr.f32.mxu0 0.0
    %v1027 = vand.u32 %v408, 4294901760
    %v1028 = vsub.f32 %v408, %v1027
    %v1029 = vand.u32 %v1028, 4294901760
    %1030 = vmatmul.mubr.f32.gmra.mrb[0].mxu0 %v1029
    %v1031 = vpop.f32.mrb[0].mxu0
    %v1032 = vadd.f32 %v893, %v1031
    %v1033 = vpop.f32.mrb[0].mxu0
    %1034 = vmatprep.mubr.f32.mxu0 0.0
    %v1035 = vand.u32 %v409, 4294901760
    %v1036 = vsub.f32 %v409, %v1035
    %v1037 = vand.u32 %v1036, 4294901760
    %1038 = vmatmul.mubr.f32.gmra.mrb[0].mxu0 %v1037
    %v1039 = vpop.f32.mrb[0].mxu0
    %v1040 = vadd.f32 %v900, %v1039
    %v1041 = vpop.f32.mrb[0].mxu0
    %1042 = vmatprep.mubr.f32.mxu0 0.0
    %v1043 = vand.u32 %v410, 4294901760
    %v1044 = vsub.f32 %v410, %v1043
    %v1045 = vand.u32 %v1044, 4294901760
    %1046 = vmatmul.mubr.f32.gmra.mrb[0].mxu0 %v1045
    %v1047 = vpop.f32.mrb[0].mxu0
    %v1048 = vadd.f32 %v907, %v1047
    %v1049 = vpop.f32.mrb[0].mxu0
    %1050 = vmatprep.mubr.f32.mxu0 0.0
    %v1051 = vand.u32 %v411, 4294901760
    %v1052 = vsub.f32 %v411, %v1051
    %v1053 = vand.u32 %v1052, 4294901760
    %1054 = vmatmul.mubr.f32.gmra.mrb[0].mxu0 %v1053
    %v1055 = vpop.f32.mrb[0].mxu0
    %v1056 = vadd.f32 %v914, %v1055
    %v1057 = vpop.f32.mrb[0].mxu0
    %1058 = vmatprep.mubr.f32.mxu0 0.0
    %v1059 = vand.u32 %v412, 4294901760
    %v1060 = vsub.f32 %v412, %v1059
    %v1061 = vand.u32 %v1060, 4294901760
    %1062 = vmatmul.mubr.f32.gmra.mrb[0].mxu0 %v1061
    %v1063 = vpop.f32.mrb[0].mxu0
    %v1064 = vadd.f32 %v921, %v1063
    %v1065 = vpop.f32.mrb[0].mxu0
    %1066 = vmatprep.mubr.f32.mxu0 0.0
    %v1067 = vand.u32 %v413, 4294901760
    %v1068 = vsub.f32 %v413, %v1067
    %v1069 = vand.u32 %v1068, 4294901760
    %1070 = vmatmul.mubr.f32.gmra.mrb[0].mxu0 %v1069
    %v1071 = vpop.f32.mrb[0].mxu0
    %v1072 = vadd.f32 %v928, %v1071
    %v1073 = vpop.f32.mrb[0].mxu0
    %1074 = vmatprep.mubr.f32.mxu0 0.0
    %v1075 = vand.u32 %v414, 4294901760
    %v1076 = vsub.f32 %v414, %v1075
    %v1077 = vand.u32 %v1076, 4294901760
    %1078 = vmatmul.mubr.f32.gmra.mrb[0].mxu0 %v1077
    %v1079 = vpop.f32.mrb[0].mxu0
    %v1080 = vadd.f32 %v935, %v1079
    %v1081 = vpop.f32.mrb[0].mxu0
    %1082 = vdwg.mxu0
    %1083 = vmatprep.subr.mxu0 0.0
    %v1084 = vand.u32 %v415, 4294901760
    %v1085 = vsub.f32 %v415, %v1084
    %v1086 = vand.u32 %v1085, 4294901760
    %1087 = vmatpush1.msra.mxu0 %v1086
    %1088 = vmatprep.subr.mxu0 0.0
    %v1089 = vand.u32 %v416, 4294901760
    %v1090 = vsub.f32 %v416, %v1089
    %v1091 = vand.u32 %v1090, 4294901760
    %1092 = vmatpush1.msra.mxu0 %v1091
    %1093 = vmatprep.subr.mxu0 0.0
    %v1094 = vand.u32 %v417, 4294901760
    %v1095 = vsub.f32 %v417, %v1094
    %v1096 = vand.u32 %v1095, 4294901760
    %1097 = vmatpush1.msra.mxu0 %v1096
    %1098 = vmatprep.subr.mxu0 0.0
    %v1099 = vand.u32 %v418, 4294901760
    %v1100 = vsub.f32 %v418, %v1099
    %v1101 = vand.u32 %v1100, 4294901760
    %1102 = vmatpush1.msra.mxu0 %v1101
    %1103 = vmatprep.subr.mxu0 0.0
    %v1104 = vand.u32 %v419, 4294901760
    %v1105 = vsub.f32 %v419, %v1104
    %v1106 = vand.u32 %v1105, 4294901760
    %1107 = vmatpush1.msra.mxu0 %v1106
    %1108 = vmatprep.subr.mxu0 0.0
    %v1109 = vand.u32 %v420, 4294901760
    %v1110 = vsub.f32 %v420, %v1109
    %v1111 = vand.u32 %v1110, 4294901760
    %1112 = vmatpush1.msra.mxu0 %v1111
    %1113 = vmatprep.subr.mxu0 0.0
    %v1114 = vand.u32 %v421, 4294901760
    %v1115 = vsub.f32 %v421, %v1114
    %v1116 = vand.u32 %v1115, 4294901760
    %1117 = vmatpush1.msra.mxu0 %v1116
    %1118 = vmatprep.subr.mxu0 0.0
    %v1119 = vand.u32 %v422, 4294901760
    %v1120 = vsub.f32 %v422, %v1119
    %v1121 = vand.u32 %v1120, 4294901760
    %1122 = vmatpush1.msra.mxu0 %v1121
    %1123 = vmatprep.subr.mxu0 0.0
    %v1124 = vand.u32 %v423, 4294901760
    %v1125 = vsub.f32 %v423, %v1124
    %v1126 = vand.u32 %v1125, 4294901760
    %1127 = vmatpush1.msra.mxu0 %v1126
    %1128 = vmatprep.subr.mxu0 0.0
    %v1129 = vand.u32 %v424, 4294901760
    %v1130 = vsub.f32 %v424, %v1129
    %v1131 = vand.u32 %v1130, 4294901760
    %1132 = vmatpush1.msra.mxu0 %v1131
    %1133 = vmatprep.subr.mxu0 0.0
    %v1134 = vand.u32 %v425, 4294901760
    %v1135 = vsub.f32 %v425, %v1134
    %v1136 = vand.u32 %v1135, 4294901760
    %1137 = vmatpush1.msra.mxu0 %v1136
    %1138 = vmatprep.subr.mxu0 0.0
    %v1139 = vand.u32 %v426, 4294901760
    %v1140 = vsub.f32 %v426, %v1139
    %v1141 = vand.u32 %v1140, 4294901760
    %1142 = vmatpush1.msra.mxu0 %v1141
    %1143 = vmatprep.subr.mxu0 0.0
    %v1144 = vand.u32 %v427, 4294901760
    %v1145 = vsub.f32 %v427, %v1144
    %v1146 = vand.u32 %v1145, 4294901760
    %1147 = vmatpush1.msra.mxu0 %v1146
    %1148 = vmatprep.subr.mxu0 0.0
    %v1149 = vand.u32 %v428, 4294901760
    %v1150 = vsub.f32 %v428, %v1149
    %v1151 = vand.u32 %v1150, 4294901760
    %1152 = vmatpush1.msra.mxu0 %v1151
    %1153 = vmatprep.subr.mxu0 0.0
    %v1154 = vand.u32 %v429, 4294901760
    %v1155 = vsub.f32 %v429, %v1154
    %v1156 = vand.u32 %v1155, 4294901760
    %1157 = vmatpush1.msra.mxu0 %v1156
    %1158 = vmatprep.subr.mxu0 0.0
    %v1159 = vand.u32 %v430, 4294901760
    %v1160 = vsub.f32 %v430, %v1159
    %v1161 = vand.u32 %v1160, 4294901760
    %1162 = vmatpush1.msra.mxu0 %v1161
    %1163 = vmatprep.subr.mxu0 0.0
    %1164 = vmatpush1.msra.mxu0 0.0
    %1165 = vmatprep.subr.mxu0 0.0
    %1166 = vmatpush1.msra.mxu0 0.0
    %1167 = vmatprep.subr.mxu0 0.0
    %1168 = vmatpush1.msra.mxu0 0.0
    %1169 = vmatprep.subr.mxu0 0.0
    %1170 = vmatpush1.msra.mxu0 0.0
    %1171 = vmatprep.subr.mxu0 0.0
    %1172 = vmatpush1.msra.mxu0 0.0
    %1173 = vmatprep.subr.mxu0 0.0
    %1174 = vmatpush1.msra.mxu0 0.0
    %1175 = vmatprep.subr.mxu0 0.0
    %1176 = vmatpush1.msra.mxu0 0.0
    %1177 = vmatprep.subr.mxu0 0.0
    %1178 = vmatpush1.msra.mxu0 0.0
    %1179 = vmatprep.subr.mxu0 0.0
    %1180 = vmatpush1.msra.mxu0 0.0
    %1181 = vmatprep.subr.mxu0 0.0
    %1182 = vmatpush1.msra.mxu0 0.0
    %1183 = vmatprep.subr.mxu0 0.0
    %1184 = vmatpush1.msra.mxu0 0.0
    %1185 = vmatprep.subr.mxu0 0.0
    %1186 = vmatpush1.msra.mxu0 0.0
    %1187 = vmatprep.subr.mxu0 0.0
    %1188 = vmatpush1.msra.mxu0 0.0
    %1189 = vmatprep.subr.mxu0 0.0
    %1190 = vmatpush1.msra.mxu0 0.0
    %1191 = vmatprep.subr.mxu0 0.0
    %1192 = vmatpush1.msra.mxu0 0.0
    %1193 = vmatprep.subr.mxu0 0.0
    %1194 = vmatpush1.msra.mxu0 0.0
    %1195 = vmatprep.mubr.f32.mxu0 0.0
    %v1196 = vand.u32 %v407, 4294901760
    %1197 = vmatmul.mubr.f32.gmra.mrb[0].mxu0 %v1196
    %v1198 = vpop.f32.mrb[0].mxu0
    %v1199 = vadd.f32 %v1024, %v1198
    %v1200 = vpop.f32.mrb[0].mxu0
    %1201 = vmatprep.mubr.f32.mxu0 0.0
    %v1202 = vand.u32 %v408, 4294901760
    %1203 = vmatmul.mubr.f32.gmra.mrb[0].mxu0 %v1202
    %v1204 = vpop.f32.mrb[0].mxu0
    %v1205 = vadd.f32 %v1032, %v1204
    %v1206 = vpop.f32.mrb[0].mxu0
    %1207 = vmatprep.mubr.f32.mxu0 0.0
    %v1208 = vand.u32 %v409, 4294901760
    %1209 = vmatmul.mubr.f32.gmra.mrb[0].mxu0 %v1208
    %v1210 = vpop.f32.mrb[0].mxu0
    %v1211 = vadd.f32 %v1040, %v1210
    %v1212 = vpop.f32.mrb[0].mxu0
    %1213 = vmatprep.mubr.f32.mxu0 0.0
    %v1214 = vand.u32 %v410, 4294901760
    %1215 = vmatmul.mubr.f32.gmra.mrb[0].mxu0 %v1214
    %v1216 = vpop.f32.mrb[0].mxu0
    %v1217 = vadd.f32 %v1048, %v1216
    %v1218 = vpop.f32.mrb[0].mxu0
    %1219 = vmatprep.mubr.f32.mxu0 0.0
    %v1220 = vand.u32 %v411, 4294901760
    %1221 = vmatmul.mubr.f32.gmra.mrb[0].mxu0 %v1220
    %v1222 = vpop.f32.mrb[0].mxu0
    %v1223 = vadd.f32 %v1056, %v1222
    %v1224 = vpop.f32.mrb[0].mxu0
    %1225 = vmatprep.mubr.f32.mxu0 0.0
    %v1226 = vand.u32 %v412, 4294901760
    %1227 = vmatmul.mubr.f32.gmra.mrb[0].mxu0 %v1226
    %v1228 = vpop.f32.mrb[0].mxu0
    %v1229 = vadd.f32 %v1064, %v1228
    %v1230 = vpop.f32.mrb[0].mxu0
    %1231 = vmatprep.mubr.f32.mxu0 0.0
    %v1232 = vand.u32 %v413, 4294901760
    %1233 = vmatmul.mubr.f32.gmra.mrb[0].mxu0 %v1232
    %v1234 = vpop.f32.mrb[0].mxu0
    %v1235 = vadd.f32 %v1072, %v1234
    %v1236 = vpop.f32.mrb[0].mxu0
    %1237 = vmatprep.mubr.f32.mxu0 0.0
    %v1238 = vand.u32 %v414, 4294901760
    %1239 = vmatmul.mubr.f32.gmra.mrb[0].mxu0 %v1238
    %v1240 = vpop.f32.mrb[0].mxu0
    %v1241 = vadd.f32 %v1080, %v1240
    %v1242 = vpop.f32.mrb[0].mxu0
    %1243 = vdwg.mxu0
    %1244 = vmatprep.subr.mxu0 0.0
    %v1245 = vand.u32 %v415, 4294901760
    %1246 = vmatpush1.msra.mxu0 %v1245
    %1247 = vmatprep.subr.mxu0 0.0
    %v1248 = vand.u32 %v416, 4294901760
    %1249 = vmatpush1.msra.mxu0 %v1248
    %1250 = vmatprep.subr.mxu0 0.0
    %v1251 = vand.u32 %v417, 4294901760
    %1252 = vmatpush1.msra.mxu0 %v1251
    %1253 = vmatprep.subr.mxu0 0.0
    %v1254 = vand.u32 %v418, 4294901760
    %1255 = vmatpush1.msra.mxu0 %v1254
    %1256 = vmatprep.subr.mxu0 0.0
    %v1257 = vand.u32 %v419, 4294901760
    %1258 = vmatpush1.msra.mxu0 %v1257
    %1259 = vmatprep.subr.mxu0 0.0
    %v1260 = vand.u32 %v420, 4294901760
    %1261 = vmatpush1.msra.mxu0 %v1260
    %1262 = vmatprep.subr.mxu0 0.0
    %v1263 = vand.u32 %v421, 4294901760
    %1264 = vmatpush1.msra.mxu0 %v1263
    %1265 = vmatprep.subr.mxu0 0.0
    %v1266 = vand.u32 %v422, 4294901760
    %1267 = vmatpush1.msra.mxu0 %v1266
    %1268 = vmatprep.subr.mxu0 0.0
    %v1269 = vand.u32 %v423, 4294901760
    %1270 = vmatpush1.msra.mxu0 %v1269
    %1271 = vmatprep.subr.mxu0 0.0
    %v1272 = vand.u32 %v424, 4294901760
    %1273 = vmatpush1.msra.mxu0 %v1272
    %1274 = vmatprep.subr.mxu0 0.0
    %v1275 = vand.u32 %v425, 4294901760
    %1276 = vmatpush1.msra.mxu0 %v1275
    %1277 = vmatprep.subr.mxu0 0.0
    %v1278 = vand.u32 %v426, 4294901760
    %1279 = vmatpush1.msra.mxu0 %v1278
    %1280 = vmatprep.subr.mxu0 0.0
    %v1281 = vand.u32 %v427, 4294901760
    %1282 = vmatpush1.msra.mxu0 %v1281
    %1283 = vmatprep.subr.mxu0 0.0
    %v1284 = vand.u32 %v428, 4294901760
    %1285 = vmatpush1.msra.mxu0 %v1284
    %1286 = vmatprep.subr.mxu0 0.0
    %v1287 = vand.u32 %v429, 4294901760
    %1288 = vmatpush1.msra.mxu0 %v1287
    %1289 = vmatprep.subr.mxu0 0.0
    %v1290 = vand.u32 %v430, 4294901760
    %1291 = vmatpush1.msra.mxu0 %v1290
    %1292 = vmatprep.subr.mxu0 0.0
    %1293 = vmatpush1.msra.mxu0 0.0
    %1294 = vmatprep.subr.mxu0 0.0
    %1295 = vmatpush1.msra.mxu0 0.0
    %1296 = vmatprep.subr.mxu0 0.0
    %1297 = vmatpush1.msra.mxu0 0.0
    %1298 = vmatprep.subr.mxu0 0.0
    %1299 = vmatpush1.msra.mxu0 0.0
    %1300 = vmatprep.subr.mxu0 0.0
    %1301 = vmatpush1.msra.mxu0 0.0
    %1302 = vmatprep.subr.mxu0 0.0
    %1303 = vmatpush1.msra.mxu0 0.0
    %1304 = vmatprep.subr.mxu0 0.0
    %1305 = vmatpush1.msra.mxu0 0.0
    %1306 = vmatprep.subr.mxu0 0.0
    %1307 = vmatpush1.msra.mxu0 0.0
    %1308 = vmatprep.subr.mxu0 0.0
    %1309 = vmatpush1.msra.mxu0 0.0
    %1310 = vmatprep.subr.mxu0 0.0
    %1311 = vmatpush1.msra.mxu0 0.0
    %1312 = vmatprep.subr.mxu0 0.0
    %1313 = vmatpush1.msra.mxu0 0.0
    %1314 = vmatprep.subr.mxu0 0.0
    %1315 = vmatpush1.msra.mxu0 0.0
    %1316 = vmatprep.subr.mxu0 0.0
    %1317 = vmatpush1.msra.mxu0 0.0
    %1318 = vmatprep.subr.mxu0 0.0
    %1319 = vmatpush1.msra.mxu0 0.0
    %1320 = vmatprep.subr.mxu0 0.0
    %1321 = vmatpush1.msra.mxu0 0.0
    %1322 = vmatprep.subr.mxu0 0.0
    %1323 = vmatpush1.msra.mxu0 0.0
    %1324 = vmatprep.mubr.f32.mxu0 0.0
    %v1325 = vand.u32 %v407, 4294901760
    %1326 = vmatmul.mubr.f32.gmra.mrb[0].mxu0 %v1325
    %v1327 = vpop.f32.mrb[0].mxu0
    %v1328 = vadd.f32 %v1199, %v1327
    %v1329 = vpop.f32.mrb[0].mxu0
    %1330 = vmatprep.mubr.f32.mxu0 0.0
    %v1331 = vand.u32 %v408, 4294901760
    %1332 = vmatmul.mubr.f32.gmra.mrb[0].mxu0 %v1331
    %v1333 = vpop.f32.mrb[0].mxu0
    %v1334 = vadd.f32 %v1205, %v1333
    %v1335 = vpop.f32.mrb[0].mxu0
    %1336 = vmatprep.mubr.f32.mxu0 0.0
    %v1337 = vand.u32 %v409, 4294901760
    %1338 = vmatmul.mubr.f32.gmra.mrb[0].mxu0 %v1337
    %v1339 = vpop.f32.mrb[0].mxu0
    %v1340 = vadd.f32 %v1211, %v1339
    %v1341 = vpop.f32.mrb[0].mxu0
    %1342 = vmatprep.mubr.f32.mxu0 0.0
    %v1343 = vand.u32 %v410, 4294901760
    %1344 = vmatmul.mubr.f32.gmra.mrb[0].mxu0 %v1343
    %v1345 = vpop.f32.mrb[0].mxu0
    %v1346 = vadd.f32 %v1217, %v1345
    %v1347 = vpop.f32.mrb[0].mxu0
    %1348 = vmatprep.mubr.f32.mxu0 0.0
    %v1349 = vand.u32 %v411, 4294901760
    %1350 = vmatmul.mubr.f32.gmra.mrb[0].mxu0 %v1349
    %v1351 = vpop.f32.mrb[0].mxu0
    %v1352 = vadd.f32 %v1223, %v1351
    %v1353 = vpop.f32.mrb[0].mxu0
    %1354 = vmatprep.mubr.f32.mxu0 0.0
    %v1355 = vand.u32 %v412, 4294901760
    %1356 = vmatmul.mubr.f32.gmra.mrb[0].mxu0 %v1355
    %v1357 = vpop.f32.mrb[0].mxu0
    %v1358 = vadd.f32 %v1229, %v1357
    %v1359 = vpop.f32.mrb[0].mxu0
    %1360 = vmatprep.mubr.f32.mxu0 0.0
    %v1361 = vand.u32 %v413, 4294901760
    %1362 = vmatmul.mubr.f32.gmra.mrb[0].mxu0 %v1361
    %v1363 = vpop.f32.mrb[0].mxu0
    %v1364 = vadd.f32 %v1235, %v1363
    %v1365 = vpop.f32.mrb[0].mxu0
    %1366 = vmatprep.mubr.f32.mxu0 0.0
    %v1367 = vand.u32 %v414, 4294901760
    %1368 = vmatmul.mubr.f32.gmra.mrb[0].mxu0 %v1367
    %v1369 = vpop.f32.mrb[0].mxu0
    %v1370 = vadd.f32 %v1241, %v1369
    %v1371 = vpop.f32.mrb[0].mxu0
    %1372 = vdwg.mxu0
    %1373 = vst [vmem:[#allocation7] sm:$0xff] %v1328
    %1374 = vst [vmem:[#allocation7 + $0x8] sm:$0xff] %v1334
    %1375 = vst [vmem:[#allocation7 + $0x10] sm:$0xff] %v1340
    %1376 = vst [vmem:[#allocation7 + $0x18] sm:$0xff] %v1346
    %1377 = vst [vmem:[#allocation7 + $0x20] sm:$0xff] %v1352
    %1378 = vst [vmem:[#allocation7 + $0x28] sm:$0xff] %v1358
    %1379 = vst [vmem:[#allocation7 + $0x30] sm:$0xff] %v1364
    %1380 = vst [vmem:[#allocation7 + $0x38] sm:$0xff] %v1370
    // Predicated region
    $region18: #{tpu_custom_call.1} parent=1 // pred_check
      _
    $region19: #{tpu_custom_call.1} parent=1 // pred_check_branch
      %1382 = sbr.rel (0) target = $region21
    $region20: #{tpu_custom_call.1} parent=1 // pred_region
      %s1384 = ssub.s32 1024, 1024
      %1385 = vsyncadd [#allocation4], %s1384
      %s1386 = sshll.u32 [#allocation7], 4
      %s1387 = int_to_ptr.vmem [resolvable:$true] %s1386
      %1392 = dma.vmem_to_hbm [thread:$0]  %s1387, 1024, %s2, [#allocation4], 128, 128, 8
    $region21: #{tpu_custom_call.1} parent=1 // pred_fallthru
      _
    // Predicated region
    $region22: #{tpu_custom_call.1} parent=1 // pred_check
      _
    $region23: #{tpu_custom_call.1} parent=1 // pred_check_branch
      %1394 = sbr.rel (0) target = $region25
    $region24: #{tpu_custom_call.1} parent=1 // pred_region
      %1395 = dma.done [#allocation4], 1024
    $region25: #{tpu_custom_call.1} parent=1 // pred_fallthru
      _
    %1396 = vsyncpa [#allocation3], 1
    %1397 = vsyncpa [#allocation6], 1
    %1398 = vsyncpa [#allocation4], 1

</llo_original>
